<compile_context>
chip_gen: v7x
topology: tpu7x:2x2x1
jax: 0.10.0
libtpu: 0.0.40
codegen_flags: <defaults>
</compile_context>

<pallas_src>
from functools import partial

import jax
import jax.numpy as jnp
from jax import lax
from jax.experimental import pallas as pl
from jax.experimental.pallas import tpu as pltpu


def _bn_train(x, gamma, beta, eps=1e-5):
    # PyTorch BatchNorm1d training mode: batch mean / biased batch variance.
    # Single-pass stats (var = E[x^2] - mean^2); mean folded into the affine so the
    # normalization is one fused elementwise pass over x.
    mean = jnp.mean(x, axis=0, keepdims=True)
    mean_sq = jnp.mean(x * x, axis=0, keepdims=True)
    var = mean_sq - mean * mean
    scale = lax.rsqrt(var + eps) * gamma
    return x * scale + (beta - mean * scale)


def _recip(x):
    # EUP approximate reciprocal + one Newton step (keeps ~f32 accuracy while
    # freeing VALU slots vs. an exact divide chain).
    r = pl.reciprocal(x, approx=True)
    return r * (2.0 - x * r)


def gated_gcn_kernel(
    h_ref, e_ref,
    w_node_ref, b_node_ref,            # fused [A|B|D|E] projection: (D,4D) bf16, (1,4D) f32
    wc_ref, bc_ref,                    # edge projection C: (D,D) bf16, (1,D) f32
    ssrc_ref, sdst_ref, sdstT_ref,     # bf16 one-hot selectors: (E,N), (E,N), (N,E)
    gh_ref, bh_ref, ge_ref, be2_ref,   # BatchNorm affine params (1,D) f32 each
    h_out_ref, e_out_ref,
    msg_ref,                           # (E, 2D) bf16 VMEM scratch for [msg | sigma]
):
    f32 = jnp.float32
    bf16 = jnp.bfloat16
    h = h_ref[...]            # (N, D) f32 (kept f32 for the residual add)
    e = e_ref[...]            # (E, D) f32
    D = h.shape[1]

    # --- Fused node projections: ONE (N, 4D) bf16 MXU matmul with f32 accumulation.
    # Column layout of `proj`: [ Ah | Bh | Dh | Eh ].
    proj = jnp.dot(h.astype(bf16), w_node_ref[...],
                   preferred_element_type=f32) + b_node_ref[...]
    Ah = proj[:, :D]
    # bf16 copy of the [Bh | Dh | Eh] columns (gather operands); slices are at
    # 128-lane boundaries so they stay tile-aligned.
    proj_bde = proj[:, D:].astype(bf16)                               # (N, 3D)

    # Edge projection C (different input matrix, cannot fuse with the node one).
    Ce = jnp.dot(e.astype(bf16), wc_ref[...],
                 preferred_element_type=f32) + bc_ref[...]

    # --- Fused src-gather: [Bh | Dh] with ONE (E,N)x(N,2D) bf16 MXU pass;
    # selectors are consumed as bf16 directly (no VPU upcast).
    bh_dh_u = jnp.dot(ssrc_ref[...], proj_bde[:, :2 * D],
                      preferred_element_type=f32)                     # (E, 2D)
    Bh_u = bh_dh_u[:, :D]
    Dh_u = bh_dh_u[:, D:]
    Eh_v = jnp.dot(sdst_ref[...], proj_bde[:, 2 * D:],
                   preferred_element_type=f32)                        # (E, D)

    # apply_edges(u_add_v('Dh','Eh','DEh'));  e = DEh + Ce;  sigma = sigmoid(e)
    e_new = Dh_u + Eh_v + Ce
    sigma = _recip(1.0 + jnp.exp(-e_new))

    # --- Fused dst scatter-sum: assemble [Bh_u*sigma | sigma] into the bf16 VMEM
    # scratch with two lane-aligned stores, then ONE (N,E)x(E,2D) matmul with the
    # pre-built transposed selector (large operand contracts its lane axis).
    msg_ref[:, :D] = (Bh_u * sigma).astype(bf16)
    msg_ref[:, D:] = sigma.astype(bf16)
    scat = jnp.dot(sdstT_ref[...], msg_ref[...],
                   preferred_element_type=f32)                        # (N, 2D)
    sum_sigma_h = scat[:, :D]
    sum_sigma = scat[:, D:]

    h_new = Ah + sum_sigma_h * _recip(sum_sigma + 1e-6)

    # BatchNorm1d (training-mode batch stats) + ReLU, all in f32.
    h_act = jnp.maximum(_bn_train(h_new, gh_ref[...], bh_ref[...]), 0.0)
    e_act = jnp.maximum(_bn_train(e_new, ge_ref[...], be2_ref[...]), 0.0)

    # Residual (input_dim == output_dim).
    # TODO(synk): dropout(p=0.0) is the identity; non-zero-p training dropout omitted.
    h_out_ref[...] = h + h_act
    e_out_ref[...] = e + e_act


@partial(jax.jit, donate_argnums=(0, 1))
def gated_gcn_layer(h, e, src, dst, params):
    """h:(N,D) e:(E,D) f32, src,dst:(E,) int32, params: dict of weights/biases."""
    N, D = h.shape
    E = e.shape[0]
    bf16 = jnp.bfloat16

    # Dense one-hot selectors (exact in bf16; consumed by the MXU as bf16).
    s_src = jax.nn.one_hot(src, N, dtype=bf16)                               # (E, N)
    s_dst = jax.nn.one_hot(dst, N, dtype=bf16)                               # (E, N)
    # Build the transposed selector directly — no (E,N)->(N,E) relayout in XLA.
    s_dst_t = (jnp.arange(N, dtype=dst.dtype)[:, None] == dst[None, :]).astype(bf16)  # (N, E)

    # Fuse the four node projections (A,B,D,E) into one (D,4D) weight / (1,4D) bias;
    # weights stored bf16 (half the DMA bytes), biases stay f32 (added post-accum).
    w_node = jnp.concatenate(
        [params["WA"], params["WB"], params["WD"], params["WE"]], axis=1).astype(bf16)
    b_node = jnp.concatenate(
        [params["bA"], params["bB"], params["bD"], params["bE"]], axis=1)
    wc = params["WC"].astype(bf16)

    args = (
        h, e,
        w_node, b_node,
        wc, params["bC"],
        s_src, s_dst, s_dst_t,
        params["gamma_h"], params["beta_h"], params["gamma_e"], params["beta_e"],
    )

    vmem = pl.BlockSpec(memory_space=pltpu.MemorySpace.VMEM)
    return pl.pallas_call(
        gated_gcn_kernel,
        out_shape=(
            jax.ShapeDtypeStruct((N, D), jnp.float32),
            jax.ShapeDtypeStruct((E, D), jnp.float32),
        ),
        in_specs=[vmem] * len(args),
        out_specs=(vmem, vmem),
        scratch_shapes=[pltpu.VMEM((E, 2 * D), bf16)],
        # h / e are donated at the jit boundary, so aliasing the residual outputs to
        # them reuses their HBM buffers without defensive copies.
        input_output_aliases={0: 0, 1: 1},
        # Explicit VMEM budget (v5e scoped default is 16 MiB; v7x physical is 64 MiB).
        compiler_params=pltpu.CompilerParams(vmem_limit_bytes=32 * 1024 * 1024),
    )(*args)


def reference(h, e, src, dst, p):
    # Pure-JAX f32 reference matching the PyTorch forward (training mode, p=0 dropout).
    Ah = h @ p["WA"] + p["bA"]
    Bh = h @ p["WB"] + p["bB"]
    Ce = e @ p["WC"] + p["bC"]
    Dh = h @ p["WD"] + p["bD"]
    Eh = h @ p["WE"] + p["bE"]
    e_new = Dh[src] + Eh[dst] + Ce
    sigma = jax.nn.sigmoid(e_new)
    msg = Bh[src] * sigma
    sum_sigma_h = jnp.zeros_like(Ah).at[dst].add(msg)
    sum_sigma = jnp.zeros_like(Ah).at[dst].add(sigma)
    h_new = Ah + sum_sigma_h / (sum_sigma + 1e-6)
    h_bn = _bn_train(h_new, p["gamma_h"], p["beta_h"])
    e_bn = _bn_train(e_new, p["gamma_e"], p["beta_e"])
    return h + jnp.maximum(h_bn, 0.0), e + jnp.maximum(e_bn, 0.0)


if __name__ == "__main__":
    # D=128 keeps every matmul output / store lane-dense; N, E multiples of 8.
    N, E, D = 16, 48, 128   # nodes, edges, hidden (input_dim == output_dim)
    key = jax.random.PRNGKey(0)
    keys = jax.random.split(key, 16)

    h = jax.random.normal(keys[0], (N, D), dtype=jnp.float32)
    e = jax.random.normal(keys[1], (E, D), dtype=jnp.float32)
    src = jax.random.randint(keys[2], (E,), 0, N, dtype=jnp.int32)
    dst = jax.random.randint(keys[3], (E,), 0, N, dtype=jnp.int32)

    def lin(k, scale=0.1):
        kw, kb = jax.random.split(k)
        # stored pre-transposed: (in, out)
        W = scale * jax.random.normal(kw, (D, D), dtype=jnp.float32)
        b = scale * jax.random.normal(kb, (1, D), dtype=jnp.float32)
        return W, b

    WA, bA = lin(keys[4]); WB, bB = lin(keys[5]); WC, bC = lin(keys[6])
    WD, bD = lin(keys[7]); WE, bE = lin(keys[8])

    params = dict(
        WA=WA, bA=bA, WB=WB, bB=bB, WC=WC, bC=bC, WD=WD, bD=bD, WE=WE, bE=bE,
        gamma_h=jnp.ones((1, D), jnp.float32), beta_h=jnp.zeros((1, D), jnp.float32),
        gamma_e=jnp.ones((1, D), jnp.float32), beta_e=jnp.zeros((1, D), jnp.float32),
    )

    # Pure-JAX f32 reference — computed BEFORE the kernel call since h/e are donated.
    h_ref, e_ref = reference(h, e, src, dst, params)

    h_out, e_out = gated_gcn_layer(h, e, src, dst, params)
    jax.block_until_ready((h_out, e_out))

    # Tolerance loosened vs. the f32 reference: the kernel feeds the MXU bf16
    # operands (f32 accumulation), so per-element error is ~1e-2 at these scales.
    assert jnp.allclose(h_out, h_ref, atol=5e-2, rtol=5e-2), "h mismatch"
    assert jnp.allclose(e_out, e_ref, atol=5e-2, rtol=5e-2), "e mismatch"

    print("KERNEL_OK")
</pallas_src>

<mosaic_0001>
module attributes {stable_mosaic.version = 11 : i64} {
  func.func @gated_gcn_kernel(%arg0: memref<16x128xf32, #tpu.memory_space<vmem>>, %arg1: memref<48x128xf32, #tpu.memory_space<vmem>>, %arg2: memref<128x512xbf16, #tpu.memory_space<vmem>>, %arg3: memref<1x512xf32, #tpu.memory_space<vmem>>, %arg4: memref<128x128xbf16, #tpu.memory_space<vmem>>, %arg5: memref<1x128xf32, #tpu.memory_space<vmem>>, %arg6: memref<48x16xbf16, #tpu.memory_space<vmem>>, %arg7: memref<48x16xbf16, #tpu.memory_space<vmem>>, %arg8: memref<16x48xbf16, #tpu.memory_space<vmem>>, %arg9: memref<1x128xf32, #tpu.memory_space<vmem>>, %arg10: memref<1x128xf32, #tpu.memory_space<vmem>>, %arg11: memref<1x128xf32, #tpu.memory_space<vmem>>, %arg12: memref<1x128xf32, #tpu.memory_space<vmem>>, %arg13: memref<16x128xf32, #tpu.memory_space<vmem>>, %arg14: memref<48x128xf32, #tpu.memory_space<vmem>>, %arg15: memref<48x256xbf16, #tpu.memory_space<vmem>>) attributes {dimension_semantics = [], scalar_prefetch = 0 : i64, scratch_operands = 1 : i64, tpu.core_type = #tpu.core_type<tc>} {
    %c0 = arith.constant 0 : index
    %c0_0 = arith.constant 0 : index
    %0 = vector.load %arg0[%c0, %c0_0] : memref<16x128xf32, #tpu.memory_space<vmem>>, vector<16x128xf32>
    %c0_1 = arith.constant 0 : index
    %c0_2 = arith.constant 0 : index
    %1 = vector.load %arg1[%c0_1, %c0_2] : memref<48x128xf32, #tpu.memory_space<vmem>>, vector<48x128xf32>
    %2 = arith.truncf %0 : vector<16x128xf32> to vector<16x128xbf16>
    %c0_3 = arith.constant 0 : index
    %c0_4 = arith.constant 0 : index
    %3 = vector.load %arg2[%c0_3, %c0_4] : memref<128x512xbf16, #tpu.memory_space<vmem>>, vector<128x512xbf16>
    %cst = arith.constant dense<0.000000e+00> : vector<16x512xf32>
    %4 = tpu.matmul %2, %3, %cst {dimension_numbers = #tpu.dot_dimension_numbers<[1], [0], [0], [1], [0, 0, 1, 1], [], []>} : vector<16x128xbf16>, vector<128x512xbf16>, vector<16x512xf32> -> vector<16x512xf32>
    %c0_5 = arith.constant 0 : index
    %c0_6 = arith.constant 0 : index
    %5 = vector.load %arg3[%c0_5, %c0_6] : memref<1x512xf32, #tpu.memory_space<vmem>>, vector<1x512xf32>
    %6 = vector.broadcast %5 : vector<1x512xf32> to vector<16x512xf32>
    %7 = arith.addf %4, %6 : vector<16x512xf32>
    %8 = vector.extract_strided_slice %7 {offsets = [0, 0], sizes = [16, 128], strides = [1, 1]} : vector<16x512xf32> to vector<16x128xf32>
    %9 = vector.extract_strided_slice %7 {offsets = [0, 128], sizes = [16, 384], strides = [1, 1]} : vector<16x512xf32> to vector<16x384xf32>
    %10 = arith.truncf %9 : vector<16x384xf32> to vector<16x384xbf16>
    %11 = arith.truncf %1 : vector<48x128xf32> to vector<48x128xbf16>
    %c0_7 = arith.constant 0 : index
    %c0_8 = arith.constant 0 : index
    %12 = vector.load %arg4[%c0_7, %c0_8] : memref<128x128xbf16, #tpu.memory_space<vmem>>, vector<128x128xbf16>
    %cst_9 = arith.constant dense<0.000000e+00> : vector<48x128xf32>
    %13 = tpu.matmul %11, %12, %cst_9 {dimension_numbers = #tpu.dot_dimension_numbers<[1], [0], [0], [1], [0, 0, 1, 1], [], []>} : vector<48x128xbf16>, vector<128x128xbf16>, vector<48x128xf32> -> vector<48x128xf32>
    %c0_10 = arith.constant 0 : index
    %c0_11 = arith.constant 0 : index
    %14 = vector.load %arg5[%c0_10, %c0_11] : memref<1x128xf32, #tpu.memory_space<vmem>>, vector<1x128xf32>
    %15 = vector.broadcast %14 : vector<1x128xf32> to vector<48x128xf32>
    %16 = arith.addf %13, %15 : vector<48x128xf32>
    %c0_12 = arith.constant 0 : index
    %c0_13 = arith.constant 0 : index
    %17 = vector.load %arg6[%c0_12, %c0_13] : memref<48x16xbf16, #tpu.memory_space<vmem>>, vector<48x16xbf16>
    %18 = vector.extract_strided_slice %10 {offsets = [0, 0], sizes = [16, 256], strides = [1, 1]} : vector<16x384xbf16> to vector<16x256xbf16>
    %cst_14 = arith.constant dense<0.000000e+00> : vector<48x256xf32>
    %19 = tpu.matmul %17, %18, %cst_14 {dimension_numbers = #tpu.dot_dimension_numbers<[1], [0], [0], [1], [0, 0, 1, 1], [], []>} : vector<48x16xbf16>, vector<16x256xbf16>, vector<48x256xf32> -> vector<48x256xf32>
    %20 = vector.extract_strided_slice %19 {offsets = [0, 0], sizes = [48, 128], strides = [1, 1]} : vector<48x256xf32> to vector<48x128xf32>
    %21 = vector.extract_strided_slice %19 {offsets = [0, 128], sizes = [48, 128], strides = [1, 1]} : vector<48x256xf32> to vector<48x128xf32>
    %c0_15 = arith.constant 0 : index
    %c0_16 = arith.constant 0 : index
    %22 = vector.load %arg7[%c0_15, %c0_16] : memref<48x16xbf16, #tpu.memory_space<vmem>>, vector<48x16xbf16>
    %23 = vector.extract_strided_slice %10 {offsets = [0, 256], sizes = [16, 128], strides = [1, 1]} : vector<16x384xbf16> to vector<16x128xbf16>
    %cst_17 = arith.constant dense<0.000000e+00> : vector<48x128xf32>
    %24 = tpu.matmul %22, %23, %cst_17 {dimension_numbers = #tpu.dot_dimension_numbers<[1], [0], [0], [1], [0, 0, 1, 1], [], []>} : vector<48x16xbf16>, vector<16x128xbf16>, vector<48x128xf32> -> vector<48x128xf32>
    %25 = arith.addf %21, %24 : vector<48x128xf32>
    %26 = arith.addf %25, %16 : vector<48x128xf32>
    %cst_18 = arith.constant 0.000000e+00 : f32
    %27 = vector.broadcast %cst_18 : f32 to vector<48x128xf32>
    %28 = arith.subf %27, %26 : vector<48x128xf32>
    %29 = math.exp %28 : vector<48x128xf32>
    %cst_19 = arith.constant 1.000000e+00 : f32
    %30 = vector.broadcast %cst_19 : f32 to vector<48x128xf32>
    %31 = arith.addf %30, %29 : vector<48x128xf32>
    %32 = tpu.reciprocal %31 {approx = true} : vector<48x128xf32> -> vector<48x128xf32>
    %33 = arith.mulf %31, %32 : vector<48x128xf32>
    %cst_20 = arith.constant 2.000000e+00 : f32
    %34 = vector.broadcast %cst_20 : f32 to vector<48x128xf32>
    %35 = arith.subf %34, %33 : vector<48x128xf32>
    %36 = arith.mulf %32, %35 : vector<48x128xf32>
    %37 = arith.mulf %20, %36 : vector<48x128xf32>
    %38 = arith.truncf %37 : vector<48x128xf32> to vector<48x128xbf16>
    %c0_21 = arith.constant 0 : index
    %c0_22 = arith.constant 0 : index
    %39 = vector.load %arg15[%c0_21, %c0_22] : memref<48x256xbf16, #tpu.memory_space<vmem>>, vector<48x128xbf16>
    tpu.vector_store %arg15[%c0_21, %c0_22], %38 {strides = array<i32>} : memref<48x256xbf16, #tpu.memory_space<vmem>>, vector<48x128xbf16>,
    %40 = arith.truncf %36 : vector<48x128xf32> to vector<48x128xbf16>
    %c0_23 = arith.constant 0 : index
    %c128 = arith.constant 128 : index
    %41 = vector.load %arg15[%c0_23, %c128] : memref<48x256xbf16, #tpu.memory_space<vmem>>, vector<48x128xbf16>
    tpu.vector_store %arg15[%c0_23, %c128], %40 {strides = array<i32>} : memref<48x256xbf16, #tpu.memory_space<vmem>>, vector<48x128xbf16>,
    %c0_24 = arith.constant 0 : index
    %c0_25 = arith.constant 0 : index
    %42 = vector.load %arg8[%c0_24, %c0_25] : memref<16x48xbf16, #tpu.memory_space<vmem>>, vector<16x48xbf16>
    %c0_26 = arith.constant 0 : index
    %c0_27 = arith.constant 0 : index
    %43 = vector.load %arg15[%c0_26, %c0_27] : memref<48x256xbf16, #tpu.memory_space<vmem>>, vector<48x256xbf16>
    %cst_28 = arith.constant dense<0.000000e+00> : vector<16x256xf32>
    %44 = tpu.matmul %42, %43, %cst_28 {dimension_numbers = #tpu.dot_dimension_numbers<[1], [0], [0], [1], [0, 0, 1, 1], [], []>} : vector<16x48xbf16>, vector<48x256xbf16>, vector<16x256xf32> -> vector<16x256xf32>
    %45 = vector.extract_strided_slice %44 {offsets = [0, 0], sizes = [16, 128], strides = [1, 1]} : vector<16x256xf32> to vector<16x128xf32>
    %46 = vector.extract_strided_slice %44 {offsets = [0, 128], sizes = [16, 128], strides = [1, 1]} : vector<16x256xf32> to vector<16x128xf32>
    %cst_29 = arith.constant 9.99999997E-7 : f32
    %47 = vector.broadcast %cst_29 : f32 to vector<16x128xf32>
    %48 = arith.addf %46, %47 : vector<16x128xf32>
    %49 = tpu.reciprocal %48 {approx = true} : vector<16x128xf32> -> vector<16x128xf32>
    %50 = arith.mulf %48, %49 : vector<16x128xf32>
    %cst_30 = arith.constant 2.000000e+00 : f32
    %51 = vector.broadcast %cst_30 : f32 to vector<16x128xf32>
    %52 = arith.subf %51, %50 : vector<16x128xf32>
    %53 = arith.mulf %49, %52 : vector<16x128xf32>
    %54 = arith.mulf %45, %53 : vector<16x128xf32>
    %55 = arith.addf %8, %54 : vector<16x128xf32>
    %c0_31 = arith.constant 0 : index
    %c0_32 = arith.constant 0 : index
    %56 = vector.load %arg9[%c0_31, %c0_32] : memref<1x128xf32, #tpu.memory_space<vmem>>, vector<1x128xf32>
    %c0_33 = arith.constant 0 : index
    %c0_34 = arith.constant 0 : index
    %57 = vector.load %arg10[%c0_33, %c0_34] : memref<1x128xf32, #tpu.memory_space<vmem>>, vector<1x128xf32>
    %cst_35 = arith.constant dense<0.000000e+00> : vector<128xf32>
    %58 = vector.multi_reduction <add>, %55, %cst_35 [0] : vector<16x128xf32> to vector<128xf32>
    %59 = vector.shape_cast %58 : vector<128xf32> to vector<1x128xf32>
    %cst_36 = arith.constant 1.600000e+01 : f32
    %60 = vector.broadcast %cst_36 : f32 to vector<1x128xf32>
    %61 = arith.divf %59, %60 : vector<1x128xf32>
    %62 = arith.mulf %55, %55 : vector<16x128xf32>
    %cst_37 = arith.constant dense<0.000000e+00> : vector<128xf32>
    %63 = vector.multi_reduction <add>, %62, %cst_37 [0] : vector<16x128xf32> to vector<128xf32>
    %64 = vector.shape_cast %63 : vector<128xf32> to vector<1x128xf32>
    %cst_38 = arith.constant 1.600000e+01 : f32
    %65 = vector.broadcast %cst_38 : f32 to vector<1x128xf32>
    %66 = arith.divf %64, %65 : vector<1x128xf32>
    %67 = arith.mulf %61, %61 : vector<1x128xf32>
    %68 = arith.subf %66, %67 : vector<1x128xf32>
    %cst_39 = arith.constant 9.99999974E-6 : f32
    %69 = vector.broadcast %cst_39 : f32 to vector<1x128xf32>
    %70 = arith.addf %68, %69 : vector<1x128xf32>
    %71 = math.rsqrt %70 : vector<1x128xf32>
    %72 = arith.mulf %71, %56 : vector<1x128xf32>
    %73 = vector.broadcast %72 : vector<1x128xf32> to vector<16x128xf32>
    %74 = arith.mulf %55, %73 : vector<16x128xf32>
    %75 = arith.mulf %61, %72 : vector<1x128xf32>
    %76 = arith.subf %57, %75 : vector<1x128xf32>
    %77 = vector.broadcast %76 : vector<1x128xf32> to vector<16x128xf32>
    %78 = arith.addf %74, %77 : vector<16x128xf32>
    %cst_40 = arith.constant 0.000000e+00 : f32
    %79 = vector.broadcast %cst_40 : f32 to vector<16x128xf32>
    %80 = arith.maximumf %78, %79 : vector<16x128xf32>
    %c0_41 = arith.constant 0 : index
    %c0_42 = arith.constant 0 : index
    %81 = vector.load %arg11[%c0_41, %c0_42] : memref<1x128xf32, #tpu.memory_space<vmem>>, vector<1x128xf32>
    %c0_43 = arith.constant 0 : index
    %c0_44 = arith.constant 0 : index
    %82 = vector.load %arg12[%c0_43, %c0_44] : memref<1x128xf32, #tpu.memory_space<vmem>>, vector<1x128xf32>
    %cst_45 = arith.constant dense<0.000000e+00> : vector<128xf32>
    %83 = vector.multi_reduction <add>, %26, %cst_45 [0] : vector<48x128xf32> to vector<128xf32>
    %84 = vector.shape_cast %83 : vector<128xf32> to vector<1x128xf32>
    %cst_46 = arith.constant 4.800000e+01 : f32
    %85 = vector.broadcast %cst_46 : f32 to vector<1x128xf32>
    %86 = arith.divf %84, %85 : vector<1x128xf32>
    %87 = arith.mulf %26, %26 : vector<48x128xf32>
    %cst_47 = arith.constant dense<0.000000e+00> : vector<128xf32>
    %88 = vector.multi_reduction <add>, %87, %cst_47 [0] : vector<48x128xf32> to vector<128xf32>
    %89 = vector.shape_cast %88 : vector<128xf32> to vector<1x128xf32>
    %cst_48 = arith.constant 4.800000e+01 : f32
    %90 = vector.broadcast %cst_48 : f32 to vector<1x128xf32>
    %91 = arith.divf %89, %90 : vector<1x128xf32>
    %92 = arith.mulf %86, %86 : vector<1x128xf32>
    %93 = arith.subf %91, %92 : vector<1x128xf32>
    %cst_49 = arith.constant 9.99999974E-6 : f32
    %94 = vector.broadcast %cst_49 : f32 to vector<1x128xf32>
    %95 = arith.addf %93, %94 : vector<1x128xf32>
    %96 = math.rsqrt %95 : vector<1x128xf32>
    %97 = arith.mulf %96, %81 : vector<1x128xf32>
    %98 = vector.broadcast %97 : vector<1x128xf32> to vector<48x128xf32>
    %99 = arith.mulf %26, %98 : vector<48x128xf32>
    %100 = arith.mulf %86, %97 : vector<1x128xf32>
    %101 = arith.subf %82, %100 : vector<1x128xf32>
    %102 = vector.broadcast %101 : vector<1x128xf32> to vector<48x128xf32>
    %103 = arith.addf %99, %102 : vector<48x128xf32>
    %cst_50 = arith.constant 0.000000e+00 : f32
    %104 = vector.broadcast %cst_50 : f32 to vector<48x128xf32>
    %105 = arith.maximumf %103, %104 : vector<48x128xf32>
    %106 = arith.addf %0, %80 : vector<16x128xf32>
    %c0_51 = arith.constant 0 : index
    %c0_52 = arith.constant 0 : index
    %107 = vector.load %arg13[%c0_51, %c0_52] : memref<16x128xf32, #tpu.memory_space<vmem>>, vector<16x128xf32>
    tpu.vector_store %arg13[%c0_51, %c0_52], %106 {strides = array<i32>} : memref<16x128xf32, #tpu.memory_space<vmem>>, vector<16x128xf32>,
    %108 = arith.addf %1, %105 : vector<48x128xf32>
    %c0_53 = arith.constant 0 : index
    %c0_54 = arith.constant 0 : index
    %109 = vector.load %arg14[%c0_53, %c0_54] : memref<48x128xf32, #tpu.memory_space<vmem>>, vector<48x128xf32>
    tpu.vector_store %arg14[%c0_53, %c0_54], %108 {strides = array<i32>} : memref<48x128xf32, #tpu.memory_space<vmem>>, vector<48x128xf32>,
    return
  }
}

</mosaic_0001>

<llo_original>
// kernel: gated_gcn_layer.1
$region0: #{gated_gcn_layer.1}
  #allocation0 [shape = 'u32[]', space=smem, size = 0x4, offset = 0x4, fixed_abs, tag = 'smem constant byte address 0x4 - core index']
  #allocation1 [shape = 'u32[144,128]{1,0:T(1,128)}', space=vmem, size = 0x12000, scoped, tag = 'internal scratch']
  #allocation2 [shape = 'bf16[48,256]{1,0:T(16,128)(2,1)}', space=vmem, size = 0x6000, scoped, tag = 'scratch operand']
  %s0 = inlined_call_operand.hbm [shape: f32[16,128], index: 0, kind: input, shape index: {}, may-alias: {0,13}]
  %s1 = inlined_call_operand.hbm [shape: f32[48,128], index: 1, kind: input, shape index: {}, may-alias: {1,14}]
  %s2 = inlined_call_operand.vmem [shape: bf16[128,512], index: 2, kind: input, shape index: {}]
  %s3 = inlined_call_operand.vmem [shape: f32[1,512], index: 3, kind: input, shape index: {}]
  %s4 = inlined_call_operand.vmem [shape: bf16[128,128], index: 4, kind: input, shape index: {}]
  %s5 = inlined_call_operand.vmem [shape: f32[1,128], index: 5, kind: input, shape index: {}]
  %s6 = inlined_call_operand.vmem [shape: bf16[48,16], index: 6, kind: input, shape index: {}]
  %s7 = inlined_call_operand.vmem [shape: bf16[48,16], index: 7, kind: input, shape index: {}]
  %s8 = inlined_call_operand.vmem [shape: bf16[16,48], index: 8, kind: input, shape index: {}]
  %s9 = inlined_call_operand.vmem [shape: f32[1,128], index: 9, kind: input, shape index: {}]
  %s10 = inlined_call_operand.vmem [shape: f32[1,128], index: 10, kind: input, shape index: {}]
  %s11 = inlined_call_operand.vmem [shape: f32[1,128], index: 11, kind: input, shape index: {}]
  %s12 = inlined_call_operand.vmem [shape: f32[1,128], index: 12, kind: input, shape index: {}]
  %s13 = inlined_call_operand.hbm [shape: f32[16,128], index: 13, kind: output, shape index: {0}, may-alias: {0,13}]
  %s14 = inlined_call_operand.hbm [shape: f32[48,128], index: 14, kind: output, shape index: {1}, may-alias: {1,14}]
  %15 = xla_tuple %s13, %s14
  %s16 = sld [smem:[#allocation0]]
  $region78: #{gated_gcn_layer.1} parent=0
    _
  %s18 = ssub.s32 1, %s16
  %s19 = scalar_select 0, %s18, %s16
  $region1: #{gated_gcn_layer.1} parent=0
    #allocation3 [shape = 'u8[8192]{0}', space=vmem, size = 0x2000, scoped, tag = 'input window, operand 0, single buffered']
    #allocation4 [shape = 's32[1]{0}', space=sflag, size = 0x4, scoped, tag = 'scoped memory for gated_gcn_layer.1']
    #allocation5 [shape = 's32[1]{0}', space=sflag, size = 0x4, scoped, tag = 'scoped memory for gated_gcn_layer.1']
    #allocation6 [shape = 'u8[24576]{0}', space=vmem, size = 0x6000, scoped, tag = 'input window, operand 1, single buffered']
    #allocation7 [shape = 's32[1]{0}', space=sflag, size = 0x4, scoped, tag = 'scoped memory for gated_gcn_layer.1']
    #allocation8 [shape = 'u8[8192]{0}', space=vmem, size = 0x2000, scoped, tag = 'output window, operand 0, single buffered']
    #allocation9 [shape = 'u8[24576]{0}', space=vmem, size = 0x6000, scoped, tag = 'output window, operand 1, single buffered']
    #allocation10 [shape = 's32[1]{0}', space=sflag, size = 0x4, scoped, tag = 'scoped memory for gated_gcn_layer.1']
    %20 = vsyncpa [#allocation4], 0
    %21 = vsyncpa [#allocation7], 0
    %22 = vsyncpa [#allocation5], 0
    %23 = vsyncpa [#allocation10], 0
    // Predicated region
    $region2: #{gated_gcn_layer.1} parent=1 // pred_check
      _
    $region3: #{gated_gcn_layer.1} parent=1 // pred_check_branch
      %25 = sbr.rel (0) target = $region5
    $region4: #{gated_gcn_layer.1} parent=1 // pred_region
      %s27 = ssub.s32 256, 256
      %28 = vsyncadd [#allocation4], %s27
      %s29 = sshll.u32 [#allocation3], 4
      %s30 = int_to_ptr.vmem [resolvable:$true] %s29
      %35 = dma.hbm_to_vmem [thread:$0]  %s0, 256, %s30, [#allocation4], 128, 128, 8
    $region5: #{gated_gcn_layer.1} parent=1 // pred_fallthru
      _
    // Predicated region
    $region6: #{gated_gcn_layer.1} parent=1 // pred_check
      _
    $region7: #{gated_gcn_layer.1} parent=1 // pred_check_branch
      %37 = sbr.rel (0) target = $region9
    $region8: #{gated_gcn_layer.1} parent=1 // pred_region
      %s39 = ssub.s32 768, 768
      %40 = vsyncadd [#allocation7], %s39
      %s41 = sshll.u32 [#allocation6], 4
      %s42 = int_to_ptr.vmem [resolvable:$true] %s41
      %47 = dma.hbm_to_vmem [thread:$0]  %s1, 768, %s42, [#allocation7], 128, 128, 8
    $region9: #{gated_gcn_layer.1} parent=1 // pred_fallthru
      _
    // Predicated region
    $region10: #{gated_gcn_layer.1} parent=1 // pred_check
      _
    $region11: #{gated_gcn_layer.1} parent=1 // pred_check_branch
      %49 = sbr.rel (0) target = $region13
    $region12: #{gated_gcn_layer.1} parent=1 // pred_region
      _
    $region13: #{gated_gcn_layer.1} parent=1 // pred_fallthru
      _
    // Predicated region
    $region14: #{gated_gcn_layer.1} parent=1 // pred_check
      _
    $region15: #{gated_gcn_layer.1} parent=1 // pred_check_branch
      %51 = sbr.rel (0) target = $region17
    $region16: #{gated_gcn_layer.1} parent=1 // pred_region
      _
    $region17: #{gated_gcn_layer.1} parent=1 // pred_fallthru
      _
    // Predicated region
    $region18: #{gated_gcn_layer.1} parent=1 // pred_check
      _
    $region19: #{gated_gcn_layer.1} parent=1 // pred_check_branch
      %53 = sbr.rel (0) target = $region21
    $region20: #{gated_gcn_layer.1} parent=1 // pred_region
      _
    $region21: #{gated_gcn_layer.1} parent=1 // pred_fallthru
      _
    // Predicated region
    $region22: #{gated_gcn_layer.1} parent=1 // pred_check
      _
    $region23: #{gated_gcn_layer.1} parent=1 // pred_check_branch
      %55 = sbr.rel (0) target = $region25
    $region24: #{gated_gcn_layer.1} parent=1 // pred_region
      _
    $region25: #{gated_gcn_layer.1} parent=1 // pred_fallthru
      _
    // Predicated region
    $region26: #{gated_gcn_layer.1} parent=1 // pred_check
      _
    $region27: #{gated_gcn_layer.1} parent=1 // pred_check_branch
      %57 = sbr.rel (0) target = $region29
    $region28: #{gated_gcn_layer.1} parent=1 // pred_region
      _
    $region29: #{gated_gcn_layer.1} parent=1 // pred_fallthru
      _
    // Predicated region
    $region30: #{gated_gcn_layer.1} parent=1 // pred_check
      _
    $region31: #{gated_gcn_layer.1} parent=1 // pred_check_branch
      %59 = sbr.rel (0) target = $region33
    $region32: #{gated_gcn_layer.1} parent=1 // pred_region
      _
    $region33: #{gated_gcn_layer.1} parent=1 // pred_fallthru
      _
    // Predicated region
    $region34: #{gated_gcn_layer.1} parent=1 // pred_check
      _
    $region35: #{gated_gcn_layer.1} parent=1 // pred_check_branch
      %61 = sbr.rel (0) target = $region37
    $region36: #{gated_gcn_layer.1} parent=1 // pred_region
      _
    $region37: #{gated_gcn_layer.1} parent=1 // pred_fallthru
      _
    // Predicated region
    $region38: #{gated_gcn_layer.1} parent=1 // pred_check
      _
    $region39: #{gated_gcn_layer.1} parent=1 // pred_check_branch
      %63 = sbr.rel (0) target = $region41
    $region40: #{gated_gcn_layer.1} parent=1 // pred_region
      _
    $region41: #{gated_gcn_layer.1} parent=1 // pred_fallthru
      _
    // Predicated region
    $region42: #{gated_gcn_layer.1} parent=1 // pred_check
      _
    $region43: #{gated_gcn_layer.1} parent=1 // pred_check_branch
      %65 = sbr.rel (0) target = $region45
    $region44: #{gated_gcn_layer.1} parent=1 // pred_region
      _
    $region45: #{gated_gcn_layer.1} parent=1 // pred_fallthru
      _
    // Predicated region
    $region46: #{gated_gcn_layer.1} parent=1 // pred_check
      _
    $region47: #{gated_gcn_layer.1} parent=1 // pred_check_branch
      %67 = sbr.rel (0) target = $region49
    $region48: #{gated_gcn_layer.1} parent=1 // pred_region
      _
    $region49: #{gated_gcn_layer.1} parent=1 // pred_fallthru
      _
    // Predicated region
    $region50: #{gated_gcn_layer.1} parent=1 // pred_check
      _
    $region51: #{gated_gcn_layer.1} parent=1 // pred_check_branch
      %69 = sbr.rel (0) target = $region53
    $region52: #{gated_gcn_layer.1} parent=1 // pred_region
      _
    $region53: #{gated_gcn_layer.1} parent=1 // pred_fallthru
      _
    // Predicated region
    $region54: #{gated_gcn_layer.1} parent=1 // pred_check
      _
    $region55: #{gated_gcn_layer.1} parent=1 // pred_check_branch
      %71 = sbr.rel (0) target = $region57
    $region56: #{gated_gcn_layer.1} parent=1 // pred_region
      %72 = dma.done [#allocation4], 256
    $region57: #{gated_gcn_layer.1} parent=1 // pred_fallthru
      _
    // Predicated region
    $region58: #{gated_gcn_layer.1} parent=1 // pred_check
      _
    $region59: #{gated_gcn_layer.1} parent=1 // pred_check_branch
      %74 = sbr.rel (0) target = $region61
    $region60: #{gated_gcn_layer.1} parent=1 // pred_region
      %75 = dma.done [#allocation7], 768
    $region61: #{gated_gcn_layer.1} parent=1 // pred_fallthru
      _
    %v77 = vld [vmem:[#allocation3] sm:$0xff]
    %v78 = vld [vmem:[#allocation3 + $0x8] sm:$0xff]
    %v79 = vld [vmem:[#allocation6] sm:$0xff]
    %v80 = vld [vmem:[#allocation6 + $0x8] sm:$0xff]
    %v81 = vld [vmem:[#allocation6 + $0x10] sm:$0xff]
    %v82 = vld [vmem:[#allocation6 + $0x18] sm:$0xff]
    %v83 = vld [vmem:[#allocation6 + $0x20] sm:$0xff]
    %v84 = vld [vmem:[#allocation6 + $0x28] sm:$0xff]
    %v85 = vpack.c.bf16 %v78, %v77
    %v86 = vld [vmem:[%s2] sm:$0xff]
    %v87 = vld [vmem:[%s2 + $0x8] sm:$0xff]
    %v88 = vld [vmem:[%s2 + $0x10] sm:$0xff]
    %v89 = vld [vmem:[%s2 + $0x18] sm:$0xff]
    %v90 = vld [vmem:[%s2 + $0x20] sm:$0xff]
    %v91 = vld [vmem:[%s2 + $0x28] sm:$0xff]
    %v92 = vld [vmem:[%s2 + $0x30] sm:$0xff]
    %v93 = vld [vmem:[%s2 + $0x38] sm:$0xff]
    %v94 = vld [vmem:[%s2 + $0x40] sm:$0xff]
    %v95 = vld [vmem:[%s2 + $0x48] sm:$0xff]
    %v96 = vld [vmem:[%s2 + $0x50] sm:$0xff]
    %v97 = vld [vmem:[%s2 + $0x58] sm:$0xff]
    %v98 = vld [vmem:[%s2 + $0x60] sm:$0xff]
    %v99 = vld [vmem:[%s2 + $0x68] sm:$0xff]
    %v100 = vld [vmem:[%s2 + $0x70] sm:$0xff]
    %v101 = vld [vmem:[%s2 + $0x78] sm:$0xff]
    %v102 = vld [vmem:[%s2 + $0x80] sm:$0xff]
    %v103 = vld [vmem:[%s2 + $0x88] sm:$0xff]
    %v104 = vld [vmem:[%s2 + $0x90] sm:$0xff]
    %v105 = vld [vmem:[%s2 + $0x98] sm:$0xff]
    %v106 = vld [vmem:[%s2 + $0xa0] sm:$0xff]
    %v107 = vld [vmem:[%s2 + $0xa8] sm:$0xff]
    %v108 = vld [vmem:[%s2 + $0xb0] sm:$0xff]
    %v109 = vld [vmem:[%s2 + $0xb8] sm:$0xff]
    %v110 = vld [vmem:[%s2 + $0xc0] sm:$0xff]
    %v111 = vld [vmem:[%s2 + $0xc8] sm:$0xff]
    %v112 = vld [vmem:[%s2 + $0xd0] sm:$0xff]
    %v113 = vld [vmem:[%s2 + $0xd8] sm:$0xff]
    %v114 = vld [vmem:[%s2 + $0xe0] sm:$0xff]
    %v115 = vld [vmem:[%s2 + $0xe8] sm:$0xff]
    %v116 = vld [vmem:[%s2 + $0xf0] sm:$0xff]
    %v117 = vld [vmem:[%s2 + $0xf8] sm:$0xff]
    %v118 = vld [vmem:[%s3] sm:$0xf]
    %v120 = vlaneseq
    %v121 = vshrl.u32 %v120, 7
    %v122 = vsub.s32 0, %v121
    %v123 = vrot.slane %v118, %v122
    %v124 = vlaneseq
    %v125 = vshrl.u32 %v124, 7
    %v126 = vsub.s32 1, %v125
    %v127 = vrot.slane %v118, %v126
    %v128 = vlaneseq
    %v129 = vshrl.u32 %v128, 7
    %v130 = vsub.s32 2, %v129
    %v131 = vrot.slane %v118, %v130
    %v132 = vlaneseq
    %v133 = vshrl.u32 %v132, 7
    %v134 = vsub.s32 3, %v133
    %v135 = vrot.slane %v118, %v134
    %v172 = vunpack.c.l.b16 %v86
    %v173 = vunpack.c.h.b16 %v86
    %v174 = vunpack.c.l.b16 %v87
    %v175 = vunpack.c.h.b16 %v87
    %v176 = vunpack.c.l.b16 %v88
    %v177 = vunpack.c.h.b16 %v88
    %v178 = vunpack.c.l.b16 %v89
    %v179 = vunpack.c.h.b16 %v89
    %v180 = vunpack.c.l.b16 %v90
    %v181 = vunpack.c.h.b16 %v90
    %v182 = vunpack.c.l.b16 %v91
    %v183 = vunpack.c.h.b16 %v91
    %v184 = vunpack.c.l.b16 %v92
    %v185 = vunpack.c.h.b16 %v92
    %v186 = vunpack.c.l.b16 %v93
    %v187 = vunpack.c.h.b16 %v93
    %v188 = vunpack.c.l.b16 %v94
    %v189 = vunpack.c.h.b16 %v94
    %v190 = vunpack.c.l.b16 %v95
    %v191 = vunpack.c.h.b16 %v95
    %v192 = vunpack.c.l.b16 %v96
    %v193 = vunpack.c.h.b16 %v96
    %v194 = vunpack.c.l.b16 %v97
    %v195 = vunpack.c.h.b16 %v97
    %v196 = vunpack.c.l.b16 %v98
    %v197 = vunpack.c.h.b16 %v98
    %v198 = vunpack.c.l.b16 %v99
    %v199 = vunpack.c.h.b16 %v99
    %v200 = vunpack.c.l.b16 %v100
    %v201 = vunpack.c.h.b16 %v100
    %v202 = vunpack.c.l.b16 %v101
    %v203 = vunpack.c.h.b16 %v101
    %v204 = vunpack.c.l.b16 %v102
    %v205 = vunpack.c.h.b16 %v102
    %v206 = vunpack.c.l.b16 %v103
    %v207 = vunpack.c.h.b16 %v103
    %v208 = vunpack.c.l.b16 %v104
    %v209 = vunpack.c.h.b16 %v104
    %v210 = vunpack.c.l.b16 %v105
    %v211 = vunpack.c.h.b16 %v105
    %v212 = vunpack.c.l.b16 %v106
    %v213 = vunpack.c.h.b16 %v106
    %v214 = vunpack.c.l.b16 %v107
    %v215 = vunpack.c.h.b16 %v107
    %v216 = vunpack.c.l.b16 %v108
    %v217 = vunpack.c.h.b16 %v108
    %v218 = vunpack.c.l.b16 %v109
    %v219 = vunpack.c.h.b16 %v109
    %v220 = vunpack.c.l.b16 %v110
    %v221 = vunpack.c.h.b16 %v110
    %v222 = vunpack.c.l.b16 %v111
    %v223 = vunpack.c.h.b16 %v111
    %v224 = vunpack.c.l.b16 %v112
    %v225 = vunpack.c.h.b16 %v112
    %v226 = vunpack.c.l.b16 %v113
    %v227 = vunpack.c.h.b16 %v113
    %v228 = vunpack.c.l.b16 %v114
    %v229 = vunpack.c.h.b16 %v114
    %v230 = vunpack.c.l.b16 %v115
    %v231 = vunpack.c.h.b16 %v115
    %v232 = vunpack.c.l.b16 %v116
    %v233 = vunpack.c.h.b16 %v116
    %v234 = vunpack.c.l.b16 %v117
    %v235 = vunpack.c.h.b16 %v117
    %v236 = vpack.c.b16 %v176, %v172
    %v237 = vpack.c.b16 %v177, %v173
    %v238 = vpack.c.b16 %v178, %v174
    %v239 = vpack.c.b16 %v179, %v175
    %v240 = vpack.c.b16 %v184, %v180
    %v241 = vpack.c.b16 %v185, %v181
    %v242 = vpack.c.b16 %v186, %v182
    %v243 = vpack.c.b16 %v187, %v183
    %v244 = vpack.c.b16 %v192, %v188
    %v245 = vpack.c.b16 %v193, %v189
    %v246 = vpack.c.b16 %v194, %v190
    %v247 = vpack.c.b16 %v195, %v191
    %v248 = vpack.c.b16 %v200, %v196
    %v249 = vpack.c.b16 %v201, %v197
    %v250 = vpack.c.b16 %v202, %v198
    %v251 = vpack.c.b16 %v203, %v199
    %v252 = vpack.c.b16 %v208, %v204
    %v253 = vpack.c.b16 %v209, %v205
    %v254 = vpack.c.b16 %v210, %v206
    %v255 = vpack.c.b16 %v211, %v207
    %v256 = vpack.c.b16 %v216, %v212
    %v257 = vpack.c.b16 %v217, %v213
    %v258 = vpack.c.b16 %v218, %v214
    %v259 = vpack.c.b16 %v219, %v215
    %v260 = vpack.c.b16 %v224, %v220
    %v261 = vpack.c.b16 %v225, %v221
    %v262 = vpack.c.b16 %v226, %v222
    %v263 = vpack.c.b16 %v227, %v223
    %v264 = vpack.c.b16 %v232, %v228
    %v265 = vpack.c.b16 %v233, %v229
    %v266 = vpack.c.b16 %v234, %v230
    %v267 = vpack.c.b16 %v235, %v231
    %300 = vmatprep.subr.bf16.mxu0 %v237
    %301 = vmatpush1.bf16.msra.mxu0 %v236
    %302 = vmatprep.subr.bf16.mxu0 %v241
    %303 = vmatpush1.bf16.msra.mxu0 %v240
    %304 = vmatprep.subr.bf16.mxu0 %v245
    %305 = vmatpush1.bf16.msra.mxu0 %v244
    %306 = vmatprep.subr.bf16.mxu0 %v249
    %307 = vmatpush1.bf16.msra.mxu0 %v248
    %308 = vmatprep.subr.bf16.mxu0 %v253
    %309 = vmatpush1.bf16.msra.mxu0 %v252
    %310 = vmatprep.subr.bf16.mxu0 %v257
    %311 = vmatpush1.bf16.msra.mxu0 %v256
    %312 = vmatprep.subr.bf16.mxu0 %v261
    %313 = vmatpush1.bf16.msra.mxu0 %v260
    %314 = vmatprep.subr.bf16.mxu0 %v265
    %315 = vmatpush1.bf16.msra.mxu0 %v264
    %316 = vmatprep.subr.bf16.mxu0 0
    %317 = vmatpush1.bf16.msra.mxu0 0
    %318 = vmatprep.subr.bf16.mxu0 0
    %319 = vmatpush1.bf16.msra.mxu0 0
    %320 = vmatprep.subr.bf16.mxu0 0
    %321 = vmatpush1.bf16.msra.mxu0 0
    %322 = vmatprep.subr.bf16.mxu0 0
    %323 = vmatpush1.bf16.msra.mxu0 0
    %324 = vmatprep.subr.bf16.mxu0 0
    %325 = vmatpush1.bf16.msra.mxu0 0
    %326 = vmatprep.subr.bf16.mxu0 0
    %327 = vmatpush1.bf16.msra.mxu0 0
    %328 = vmatprep.subr.bf16.mxu0 0
    %329 = vmatpush1.bf16.msra.mxu0 0
    %330 = vmatprep.subr.bf16.mxu0 0
    %331 = vmatpush1.bf16.msra.mxu0 0
    %332 = vmatprep.mubr.bf16.mxu0 0
    %333 = vmatmul.mubr.bf16.gmra.mrb[0].mxu0 %v85
    %v334 = vpop.f32.mrb[0].mxu0
    %v335 = vadd.f32 %v123, %v334
    %v336 = vpop.f32.mrb[0].mxu0
    %v337 = vadd.f32 %v127, %v336
    %v338 = vpop.f32.mrb[0].mxu0
    %v339 = vadd.f32 %v123, %v338
    %v340 = vpop.f32.mrb[0].mxu0
    %v341 = vadd.f32 %v127, %v340
    %342 = vdwg.mxu0
    %343 = vmatprep.subr.bf16.mxu0 %v239
    %344 = vmatpush1.bf16.msra.mxu0 %v238
    %345 = vmatprep.subr.bf16.mxu0 %v243
    %346 = vmatpush1.bf16.msra.mxu0 %v242
    %347 = vmatprep.subr.bf16.mxu0 %v247
    %348 = vmatpush1.bf16.msra.mxu0 %v246
    %349 = vmatprep.subr.bf16.mxu0 %v251
    %350 = vmatpush1.bf16.msra.mxu0 %v250
    %351 = vmatprep.subr.bf16.mxu0 %v255
    %352 = vmatpush1.bf16.msra.mxu0 %v254
    %353 = vmatprep.subr.bf16.mxu0 %v259
    %354 = vmatpush1.bf16.msra.mxu0 %v258
    %355 = vmatprep.subr.bf16.mxu0 %v263
    %356 = vmatpush1.bf16.msra.mxu0 %v262
    %357 = vmatprep.subr.bf16.mxu0 %v267
    %358 = vmatpush1.bf16.msra.mxu0 %v266
    %359 = vmatprep.subr.bf16.mxu0 0
    %360 = vmatpush1.bf16.msra.mxu0 0
    %361 = vmatprep.subr.bf16.mxu0 0
    %362 = vmatpush1.bf16.msra.mxu0 0
    %363 = vmatprep.subr.bf16.mxu0 0
    %364 = vmatpush1.bf16.msra.mxu0 0
    %365 = vmatprep.subr.bf16.mxu0 0
    %366 = vmatpush1.bf16.msra.mxu0 0
    %367 = vmatprep.subr.bf16.mxu0 0
    %368 = vmatpush1.bf16.msra.mxu0 0
    %369 = vmatprep.subr.bf16.mxu0 0
    %370 = vmatpush1.bf16.msra.mxu0 0
    %371 = vmatprep.subr.bf16.mxu0 0
    %372 = vmatpush1.bf16.msra.mxu0 0
    %373 = vmatprep.subr.bf16.mxu0 0
    %374 = vmatpush1.bf16.msra.mxu0 0
    %375 = vmatprep.mubr.bf16.mxu0 0
    %376 = vmatmul.mubr.bf16.gmra.mrb[0].mxu0 %v85
    %v377 = vpop.f32.mrb[0].mxu0
    %v378 = vadd.f32 %v131, %v377
    %v379 = vpop.f32.mrb[0].mxu0
    %v380 = vadd.f32 %v135, %v379
    %v381 = vpop.f32.mrb[0].mxu0
    %v382 = vadd.f32 %v131, %v381
    %v383 = vpop.f32.mrb[0].mxu0
    %v384 = vadd.f32 %v135, %v383
    %385 = vdwg.mxu0
    %v386 = vpack.c.bf16 %v341, %v337
    %v387 = vpack.c.bf16 %v382, %v378
    %v388 = vpack.c.bf16 %v384, %v380
    %v389 = vpack.c.bf16 %v80, %v79
    %v390 = vpack.c.bf16 %v82, %v81
    %v391 = vpack.c.bf16 %v84, %v83
    %v392 = vld [vmem:[%s4] sm:$0xf]
    %v393 = vld [vmem:[%s4 + $0x4] sm:$0xf]
    %v394 = vld [vmem:[%s4 + $0x8] sm:$0xf]
    %v395 = vld [vmem:[%s4 + $0xc] sm:$0xf]
    %v396 = vld [vmem:[%s4 + $0x10] sm:$0xf]
    %v397 = vld [vmem:[%s4 + $0x14] sm:$0xf]
    %v398 = vld [vmem:[%s4 + $0x18] sm:$0xf]
    %v399 = vld [vmem:[%s4 + $0x1c] sm:$0xf]
    %v400 = vld [vmem:[%s4 + $0x20] sm:$0xf]
    %v401 = vld [vmem:[%s4 + $0x24] sm:$0xf]
    %v402 = vld [vmem:[%s4 + $0x28] sm:$0xf]
    %v403 = vld [vmem:[%s4 + $0x2c] sm:$0xf]
    %v404 = vld [vmem:[%s4 + $0x30] sm:$0xf]
    %v405 = vld [vmem:[%s4 + $0x34] sm:$0xf]
    %v406 = vld [vmem:[%s4 + $0x38] sm:$0xf]
    %v407 = vld [vmem:[%s4 + $0x3c] sm:$0xf]
    %v408 = vld [vmem:[%s5] sm:$0x1]
    %v410 = vlaneseq
    %v411 = vshrl.u32 %v410, 7
    %v412 = vsub.s32 0, %v411
    %v413 = vrot.slane %v408, %v412
    %v431 = vunpack.c.l.b16 %v392
    %v432 = vunpack.c.l.b16 %v393
    %v433 = vunpack.c.l.b16 %v394
    %v434 = vunpack.c.l.b16 %v395
    %v435 = vunpack.c.l.b16 %v396
    %v436 = vunpack.c.l.b16 %v397
    %v437 = vunpack.c.l.b16 %v398
    %v438 = vunpack.c.l.b16 %v399
    %v439 = vunpack.c.l.b16 %v400
    %v440 = vunpack.c.l.b16 %v401
    %v441 = vunpack.c.l.b16 %v402
    %v442 = vunpack.c.l.b16 %v403
    %v443 = vunpack.c.l.b16 %v404
    %v444 = vunpack.c.l.b16 %v405
    %v445 = vunpack.c.l.b16 %v406
    %v446 = vunpack.c.l.b16 %v407
    %v447 = vpack.c.b16 %v432, %v431
    %v448 = vpack.c.b16 %v434, %v433
    %v449 = vpack.c.b16 %v436, %v435
    %v450 = vpack.c.b16 %v438, %v437
    %v451 = vpack.c.b16 %v440, %v439
    %v452 = vpack.c.b16 %v442, %v441
    %v453 = vpack.c.b16 %v444, %v443
    %v454 = vpack.c.b16 %v446, %v445
    %463 = vmatprep.subr.bf16.mxu0 0
    %464 = vmatpush1.bf16.msra.mxu0 %v447
    %465 = vmatprep.subr.bf16.mxu0 0
    %466 = vmatpush1.bf16.msra.mxu0 %v448
    %467 = vmatprep.subr.bf16.mxu0 0
    %468 = vmatpush1.bf16.msra.mxu0 %v449
    %469 = vmatprep.subr.bf16.mxu0 0
    %470 = vmatpush1.bf16.msra.mxu0 %v450
    %471 = vmatprep.subr.bf16.mxu0 0
    %472 = vmatpush1.bf16.msra.mxu0 %v451
    %473 = vmatprep.subr.bf16.mxu0 0
    %474 = vmatpush1.bf16.msra.mxu0 %v452
    %475 = vmatprep.subr.bf16.mxu0 0
    %476 = vmatpush1.bf16.msra.mxu0 %v453
    %477 = vmatprep.subr.bf16.mxu0 0
    %478 = vmatpush1.bf16.msra.mxu0 %v454
    %479 = vmatprep.subr.bf16.mxu0 0
    %480 = vmatpush1.bf16.msra.mxu0 0
    %481 = vmatprep.subr.bf16.mxu0 0
    %482 = vmatpush1.bf16.msra.mxu0 0
    %483 = vmatprep.subr.bf16.mxu0 0
    %484 = vmatpush1.bf16.msra.mxu0 0
    %485 = vmatprep.subr.bf16.mxu0 0
    %486 = vmatpush1.bf16.msra.mxu0 0
    %487 = vmatprep.subr.bf16.mxu0 0
    %488 = vmatpush1.bf16.msra.mxu0 0
    %489 = vmatprep.subr.bf16.mxu0 0
    %490 = vmatpush1.bf16.msra.mxu0 0
    %491 = vmatprep.subr.bf16.mxu0 0
    %492 = vmatpush1.bf16.msra.mxu0 0
    %493 = vmatprep.subr.bf16.mxu0 0
    %494 = vmatpush1.bf16.msra.mxu0 0
    %495 = vmatprep.mubr.bf16.mxu0 0
    %496 = vmatmul.mubr.bf16.gmra.mrb[0].mxu0 %v389
    %v497 = vpop.f32.mrb[0].mxu0
    %v498 = vadd.f32 %v413, %v497
    %v499 = vpop.f32.mrb[0].mxu0
    %v500 = vpop.f32.mrb[0].mxu0
    %v501 = vadd.f32 %v413, %v500
    %v502 = vpop.f32.mrb[0].mxu0
    %503 = vmatprep.mubr.bf16.mxu0 0
    %504 = vmatmul.mubr.bf16.gmra.mrb[0].mxu0 %v390
    %v505 = vpop.f32.mrb[0].mxu0
    %v506 = vadd.f32 %v413, %v505
    %v507 = vpop.f32.mrb[0].mxu0
    %v508 = vpop.f32.mrb[0].mxu0
    %v509 = vadd.f32 %v413, %v508
    %v510 = vpop.f32.mrb[0].mxu0
    %511 = vmatprep.mubr.bf16.mxu0 0
    %512 = vmatmul.mubr.bf16.gmra.mrb[0].mxu0 %v391
    %v513 = vpop.f32.mrb[0].mxu0
    %v514 = vadd.f32 %v413, %v513
    %v515 = vpop.f32.mrb[0].mxu0
    %v516 = vpop.f32.mrb[0].mxu0
    %v517 = vadd.f32 %v413, %v516
    %v518 = vpop.f32.mrb[0].mxu0
    %519 = vdwg.mxu0
    %v520 = vld [vmem:[%s6] sm:$0xf]
    %v521 = vld [vmem:[%s6 + $0x4] sm:$0xf]
    %v522 = vld [vmem:[%s6 + $0x8] sm:$0xf]
    %v523 = vld [vmem:[%s6 + $0xc] sm:$0xf]
    %v524 = vld [vmem:[%s6 + $0x10] sm:$0xf]
    %v525 = vld [vmem:[%s6 + $0x14] sm:$0xf]
    %v532 = vunpack.c.l.b16 %v520
    %v533 = vunpack.c.l.b16 %v521
    %v534 = vunpack.c.l.b16 %v522
    %v535 = vunpack.c.l.b16 %v523
    %v536 = vunpack.c.l.b16 %v524
    %v537 = vunpack.c.l.b16 %v525
    %v538 = vpack.c.b16 %v533, %v532
    %v539 = vpack.c.b16 %v535, %v534
    %v540 = vpack.c.b16 %v537, %v536
    %vm541 = vcmask 130048
    %v543 = vsel %vm541, %v538, 0
    %v546 = vsel %vm541, %v539, 0
    %v549 = vsel %vm541, %v540, 0
    %551 = vmatprep.subr.bf16.mxu0 %v387
    %552 = vmatpush1.bf16.msra.mxu0 %v386
    %553 = vmatprep.subr.bf16.mxu0 0
    %554 = vmatpush1.bf16.msra.mxu0 0
    %555 = vmatprep.subr.bf16.mxu0 0
    %556 = vmatpush1.bf16.msra.mxu0 0
    %557 = vmatprep.subr.bf16.mxu0 0
    %558 = vmatpush1.bf16.msra.mxu0 0
    %559 = vmatprep.subr.bf16.mxu0 0
    %560 = vmatpush1.bf16.msra.mxu0 0
    %561 = vmatprep.subr.bf16.mxu0 0
    %562 = vmatpush1.bf16.msra.mxu0 0
    %563 = vmatprep.subr.bf16.mxu0 0
    %564 = vmatpush1.bf16.msra.mxu0 0
    %565 = vmatprep.subr.bf16.mxu0 0
    %566 = vmatpush1.bf16.msra.mxu0 0
    %567 = vmatprep.subr.bf16.mxu0 0
    %568 = vmatpush1.bf16.msra.mxu0 0
    %569 = vmatprep.subr.bf16.mxu0 0
    %570 = vmatpush1.bf16.msra.mxu0 0
    %571 = vmatprep.subr.bf16.mxu0 0
    %572 = vmatpush1.bf16.msra.mxu0 0
    %573 = vmatprep.subr.bf16.mxu0 0
    %574 = vmatpush1.bf16.msra.mxu0 0
    %575 = vmatprep.subr.bf16.mxu0 0
    %576 = vmatpush1.bf16.msra.mxu0 0
    %577 = vmatprep.subr.bf16.mxu0 0
    %578 = vmatpush1.bf16.msra.mxu0 0
    %579 = vmatprep.subr.bf16.mxu0 0
    %580 = vmatpush1.bf16.msra.mxu0 0
    %581 = vmatprep.subr.bf16.mxu0 0
    %582 = vmatpush1.bf16.msra.mxu0 0
    %583 = vmatprep.mubr.bf16.mxu0 0
    %584 = vmatmul.mubr.bf16.gmra.mrb[0].mxu0 %v543
    %v585 = vpop.f32.mrb[0].mxu0
    %v586 = vadd.f32 0.0, %v585
    %v587 = vpop.f32.mrb[0].mxu0
    %v588 = vadd.f32 0.0, %v587
    %v589 = vpop.f32.mrb[0].mxu0
    %v590 = vadd.f32 0.0, %v589
    %v591 = vpop.f32.mrb[0].mxu0
    %v592 = vadd.f32 0.0, %v591
    %593 = vmatprep.mubr.bf16.mxu0 0
    %594 = vmatmul.mubr.bf16.gmra.mrb[0].mxu0 %v546
    %v595 = vpop.f32.mrb[0].mxu0
    %v596 = vadd.f32 0.0, %v595
    %v597 = vpop.f32.mrb[0].mxu0
    %v598 = vadd.f32 0.0, %v597
    %v599 = vpop.f32.mrb[0].mxu0
    %v600 = vadd.f32 0.0, %v599
    %v601 = vpop.f32.mrb[0].mxu0
    %v602 = vadd.f32 0.0, %v601
    %603 = vmatprep.mubr.bf16.mxu0 0
    %604 = vmatmul.mubr.bf16.gmra.mrb[0].mxu0 %v549
    %v605 = vpop.f32.mrb[0].mxu0
    %v606 = vadd.f32 0.0, %v605
    %v607 = vpop.f32.mrb[0].mxu0
    %v608 = vadd.f32 0.0, %v607
    %v609 = vpop.f32.mrb[0].mxu0
    %v610 = vadd.f32 0.0, %v609
    %v611 = vpop.f32.mrb[0].mxu0
    %v612 = vadd.f32 0.0, %v611
    %613 = vdwg.mxu0
    %v614 = vld [vmem:[%s7] sm:$0xf]
    %v615 = vld [vmem:[%s7 + $0x4] sm:$0xf]
    %v616 = vld [vmem:[%s7 + $0x8] sm:$0xf]
    %v617 = vld [vmem:[%s7 + $0xc] sm:$0xf]
    %v618 = vld [vmem:[%s7 + $0x10] sm:$0xf]
    %v619 = vld [vmem:[%s7 + $0x14] sm:$0xf]
    %v626 = vunpack.c.l.b16 %v614
    %v627 = vunpack.c.l.b16 %v615
    %v628 = vunpack.c.l.b16 %v616
    %v629 = vunpack.c.l.b16 %v617
    %v630 = vunpack.c.l.b16 %v618
    %v631 = vunpack.c.l.b16 %v619
    %v632 = vpack.c.b16 %v627, %v626
    %v633 = vpack.c.b16 %v629, %v628
    %v634 = vpack.c.b16 %v631, %v630
    %v636 = vsel %vm541, %v632, 0
    %v639 = vsel %vm541, %v633, 0
    %v642 = vsel %vm541, %v634, 0
    %644 = vmatprep.subr.bf16.mxu0 0
    %645 = vmatpush1.bf16.msra.mxu0 %v388
    %646 = vmatprep.subr.bf16.mxu0 0
    %647 = vmatpush1.bf16.msra.mxu0 0
    %648 = vmatprep.subr.bf16.mxu0 0
    %649 = vmatpush1.bf16.msra.mxu0 0
    %650 = vmatprep.subr.bf16.mxu0 0
    %651 = vmatpush1.bf16.msra.mxu0 0
    %652 = vmatprep.subr.bf16.mxu0 0
    %653 = vmatpush1.bf16.msra.mxu0 0
    %654 = vmatprep.subr.bf16.mxu0 0
    %655 = vmatpush1.bf16.msra.mxu0 0
    %656 = vmatprep.subr.bf16.mxu0 0
    %657 = vmatpush1.bf16.msra.mxu0 0
    %658 = vmatprep.subr.bf16.mxu0 0
    %659 = vmatpush1.bf16.msra.mxu0 0
    %660 = vmatprep.subr.bf16.mxu0 0
    %661 = vmatpush1.bf16.msra.mxu0 0
    %662 = vmatprep.subr.bf16.mxu0 0
    %663 = vmatpush1.bf16.msra.mxu0 0
    %664 = vmatprep.subr.bf16.mxu0 0
    %665 = vmatpush1.bf16.msra.mxu0 0
    %666 = vmatprep.subr.bf16.mxu0 0
    %667 = vmatpush1.bf16.msra.mxu0 0
    %668 = vmatprep.subr.bf16.mxu0 0
    %669 = vmatpush1.bf16.msra.mxu0 0
    %670 = vmatprep.subr.bf16.mxu0 0
    %671 = vmatpush1.bf16.msra.mxu0 0
    %672 = vmatprep.subr.bf16.mxu0 0
    %673 = vmatpush1.bf16.msra.mxu0 0
    %674 = vmatprep.subr.bf16.mxu0 0
    %675 = vmatpush1.bf16.msra.mxu0 0
    %676 = vmatprep.mubr.bf16.mxu0 0
    %677 = vmatmul.mubr.bf16.gmra.mrb[0].mxu0 %v636
    %v678 = vpop.f32.mrb[0].mxu0
    %v679 = vadd.f32 0.0, %v678
    %v680 = vpop.f32.mrb[0].mxu0
    %v681 = vpop.f32.mrb[0].mxu0
    %v682 = vadd.f32 0.0, %v681
    %v683 = vpop.f32.mrb[0].mxu0
    %684 = vmatprep.mubr.bf16.mxu0 0
    %685 = vmatmul.mubr.bf16.gmra.mrb[0].mxu0 %v639
    %v686 = vpop.f32.mrb[0].mxu0
    %v687 = vadd.f32 0.0, %v686
    %v688 = vpop.f32.mrb[0].mxu0
    %v689 = vpop.f32.mrb[0].mxu0
    %v690 = vadd.f32 0.0, %v689
    %v691 = vpop.f32.mrb[0].mxu0
    %692 = vmatprep.mubr.bf16.mxu0 0
    %693 = vmatmul.mubr.bf16.gmra.mrb[0].mxu0 %v642
    %v694 = vpop.f32.mrb[0].mxu0
    %v695 = vadd.f32 0.0, %v694
    %v696 = vpop.f32.mrb[0].mxu0
    %v697 = vpop.f32.mrb[0].mxu0
    %v698 = vadd.f32 0.0, %v697
    %v699 = vpop.f32.mrb[0].mxu0
    %700 = vdwg.mxu0
    %v701 = vadd.f32 %v588, %v679
    %v702 = vadd.f32 %v592, %v682
    %v703 = vadd.f32 %v598, %v687
    %v704 = vadd.f32 %v602, %v690
    %v705 = vadd.f32 %v608, %v695
    %v706 = vadd.f32 %v612, %v698
    %v707 = vadd.f32 %v701, %v498
    %v708 = vadd.f32 %v702, %v501
    %v709 = vadd.f32 %v703, %v506
    %v710 = vadd.f32 %v704, %v509
    %v711 = vadd.f32 %v705, %v514
    %v712 = vadd.f32 %v706, %v517
    %v713 = vsub.f32 0.0, %v707
    %v714 = vsub.f32 0.0, %v708
    %v715 = vsub.f32 0.0, %v709
    %v716 = vsub.f32 0.0, %v710
    %v717 = vsub.f32 0.0, %v711
    %v718 = vsub.f32 0.0, %v712
    %v719 = vmul.f32 %v713, 1.442695
    %v720 = vpow.pop %v719
    %v721 = vmul.f32 %v714, 1.442695
    %v722 = vpow.pop %v721
    %v723 = vmul.f32 %v715, 1.442695
    %v724 = vpow.pop %v723
    %v725 = vmul.f32 %v716, 1.442695
    %v726 = vpow.pop %v725
    %v727 = vmul.f32 %v717, 1.442695
    %v728 = vpow.pop %v727
    %v729 = vmul.f32 %v718, 1.442695
    %v730 = vpow.pop %v729
    %v731 = vadd.f32 %v720, 1.0
    %v732 = vadd.f32 %v722, 1.0
    %v733 = vadd.f32 %v724, 1.0
    %v734 = vadd.f32 %v726, 1.0
    %v735 = vadd.f32 %v728, 1.0
    %v736 = vadd.f32 %v730, 1.0
    %v737 = vrcp.pop %v731
    %v738 = vrcp.pop %v732
    %v739 = vrcp.pop %v733
    %v740 = vrcp.pop %v734
    %v741 = vrcp.pop %v735
    %v742 = vrcp.pop %v736
    %v743 = vmul.f32 %v731, %v737
    %v744 = vmul.f32 %v732, %v738
    %v745 = vmul.f32 %v733, %v739
    %v746 = vmul.f32 %v734, %v740
    %v747 = vmul.f32 %v735, %v741
    %v748 = vmul.f32 %v736, %v742
    %v749 = vsub.f32 2.0, %v743
    %v750 = vsub.f32 2.0, %v744
    %v751 = vsub.f32 2.0, %v745
    %v752 = vsub.f32 2.0, %v746
    %v753 = vsub.f32 2.0, %v747
    %v754 = vsub.f32 2.0, %v748
    %v755 = vmul.f32 %v737, %v749
    %v756 = vmul.f32 %v738, %v750
    %v757 = vmul.f32 %v739, %v751
    %v758 = vmul.f32 %v740, %v752
    %v759 = vmul.f32 %v741, %v753
    %v760 = vmul.f32 %v742, %v754
    %v761 = vmul.f32 %v586, %v755
    %v762 = vmul.f32 %v590, %v756
    %v763 = vmul.f32 %v596, %v757
    %v764 = vmul.f32 %v600, %v758
    %v765 = vmul.f32 %v606, %v759
    %v766 = vmul.f32 %v610, %v760
    %v767 = vpack.c.bf16 %v762, %v761
    %v768 = vpack.c.bf16 %v764, %v763
    %v769 = vpack.c.bf16 %v766, %v765
    %770 = vst [vmem:[#allocation2] sm:$0xff] %v767
    %771 = vst [vmem:[#allocation2 + $0x10] sm:$0xff] %v768
    %772 = vst [vmem:[#allocation2 + $0x20] sm:$0xff] %v769
    %v773 = vpack.c.bf16 %v756, %v755
    %v774 = vpack.c.bf16 %v758, %v757
    %v775 = vpack.c.bf16 %v760, %v759
    %776 = vst [vmem:[#allocation2 + $0x8] sm:$0xff] %v773
    %777 = vst [vmem:[#allocation2 + $0x18] sm:$0xff] %v774
    %778 = vst [vmem:[#allocation2 + $0x28] sm:$0xff] %v775
    %v779 = vld [vmem:[%s8] sm:$0xf]
    %v780 = vld [vmem:[%s8 + $0x4] sm:$0xf]
    %v781 = vld [vmem:[#allocation2] sm:$0xff]
    %v782 = vld [vmem:[#allocation2 + $0x8] sm:$0xff]
    %v783 = vld [vmem:[#allocation2 + $0x10] sm:$0xff]
    %v784 = vld [vmem:[#allocation2 + $0x18] sm:$0xff]
    %v785 = vld [vmem:[#allocation2 + $0x20] sm:$0xff]
    %v786 = vld [vmem:[#allocation2 + $0x28] sm:$0xff]
    %v789 = vunpack.c.l.b16 %v779
    %v790 = vunpack.c.l.b16 %v780
    %v791 = vpack.c.b16 %v790, %v789
    %vm792 = vcmask 392192
    %v794 = vsel %vm792, %v791, 0
    %796 = vmatprep.subr.bf16.mxu0 %v782
    %797 = vmatpush1.bf16.msra.mxu0 %v781
    %798 = vmatprep.subr.bf16.mxu0 %v784
    %799 = vmatpush1.bf16.msra.mxu0 %v783
    %800 = vmatprep.subr.bf16.mxu0 %v786
    %801 = vmatpush1.bf16.msra.mxu0 %v785
    %802 = vmatprep.subr.bf16.mxu0 0
    %803 = vmatpush1.bf16.msra.mxu0 0
    %804 = vmatprep.subr.bf16.mxu0 0
    %805 = vmatpush1.bf16.msra.mxu0 0
    %806 = vmatprep.subr.bf16.mxu0 0
    %807 = vmatpush1.bf16.msra.mxu0 0
    %808 = vmatprep.subr.bf16.mxu0 0
    %809 = vmatpush1.bf16.msra.mxu0 0
    %810 = vmatprep.subr.bf16.mxu0 0
    %811 = vmatpush1.bf16.msra.mxu0 0
    %812 = vmatprep.subr.bf16.mxu0 0
    %813 = vmatpush1.bf16.msra.mxu0 0
    %814 = vmatprep.subr.bf16.mxu0 0
    %815 = vmatpush1.bf16.msra.mxu0 0
    %816 = vmatprep.subr.bf16.mxu0 0
    %817 = vmatpush1.bf16.msra.mxu0 0
    %818 = vmatprep.subr.bf16.mxu0 0
    %819 = vmatpush1.bf16.msra.mxu0 0
    %820 = vmatprep.subr.bf16.mxu0 0
    %821 = vmatpush1.bf16.msra.mxu0 0
    %822 = vmatprep.subr.bf16.mxu0 0
    %823 = vmatpush1.bf16.msra.mxu0 0
    %824 = vmatprep.subr.bf16.mxu0 0
    %825 = vmatpush1.bf16.msra.mxu0 0
    %826 = vmatprep.subr.bf16.mxu0 0
    %827 = vmatpush1.bf16.msra.mxu0 0
    %828 = vmatprep.mubr.bf16.mxu0 0
    %829 = vmatmul.mubr.bf16.gmra.mrb[0].mxu0 %v794
    %v830 = vpop.f32.mrb[0].mxu0
    %v831 = vadd.f32 0.0, %v830
    %v832 = vpop.f32.mrb[0].mxu0
    %v833 = vadd.f32 0.0, %v832
    %v834 = vpop.f32.mrb[0].mxu0
    %v835 = vadd.f32 0.0, %v834
    %v836 = vpop.f32.mrb[0].mxu0
    %v837 = vadd.f32 0.0, %v836
    %838 = vdwg.mxu0
    %v839 = vadd.f32 %v833, 1e-06
    %v840 = vadd.f32 %v837, 1e-06
    %v841 = vrcp.pop %v839
    %v842 = vrcp.pop %v840
    %v843 = vmul.f32 %v839, %v841
    %v844 = vmul.f32 %v840, %v842
    %v845 = vsub.f32 2.0, %v843
    %v846 = vsub.f32 2.0, %v844
    %v847 = vmul.f32 %v841, %v845
    %v848 = vmul.f32 %v842, %v846
    %v849 = vmul.f32 %v831, %v847
    %v850 = vmul.f32 %v835, %v848
    %v851 = vadd.f32 %v335, %v849
    %v852 = vadd.f32 %v339, %v850
    %v853 = vld [vmem:[%s9] sm:$0x1]
    %v854 = vld [vmem:[%s10] sm:$0x1]
    %v855 = vadd.f32 %v851, %v852
    %v856 = vrot.slane %v855, 4
    %v857 = vadd.f32 %v855, %v856
    %v858 = vrot.slane %v857, 2
    %v859 = vadd.f32 %v857, %v858
    %v860 = vrot.slane %v859, 1
    %v861 = vadd.f32 %v859, %v860
    %v862 = vrcp.pop 16.0
    %v863 = vmul.f32 %v861, %v862
    %v864 = vmul.f32 %v851, %v851
    %v865 = vmul.f32 %v852, %v852
    %v866 = vadd.f32 %v864, %v865
    %v867 = vrot.slane %v866, 4
    %v868 = vadd.f32 %v866, %v867
    %v869 = vrot.slane %v868, 2
    %v870 = vadd.f32 %v868, %v869
    %v871 = vrot.slane %v870, 1
    %v872 = vadd.f32 %v870, %v871
    %v873 = vmul.f32 %v872, %v862
    %v874 = vmul.f32 %v863, %v863
    %v875 = vsub.f32 %v873, %v874
    %v876 = vadd.f32 %v875, 1e-05
    %v877 = vrsqrt.pop %v876
    %v878 = vmul.f32 %v877, %v853
    %v879 = vlaneseq
    %v880 = vshrl.u32 %v879, 7
    %v881 = vsub.s32 0, %v880
    %v882 = vrot.slane %v878, %v881
    %v883 = vmul.f32 %v851, %v882
    %v884 = vmul.f32 %v852, %v882
    %v885 = vmul.f32 %v863, %v878
    %v886 = vsub.f32 %v854, %v885
    %v888 = vlaneseq
    %v889 = vshrl.u32 %v888, 7
    %v890 = vsub.s32 0, %v889
    %v891 = vrot.slane %v886, %v890
    %v893 = vadd.f32 %v883, %v891
    %v894 = vadd.f32 %v884, %v891
    %v895 = vmax.f32 %v893, 0.0
    %v896 = vmax.f32 %v894, 0.0
    %v897 = vld [vmem:[%s11] sm:$0x1]
    %v898 = vld [vmem:[%s12] sm:$0x1]
    %v899 = vadd.f32 %v707, %v708
    %v900 = vadd.f32 %v899, %v709
    %v901 = vadd.f32 %v900, %v710
    %v902 = vadd.f32 %v901, %v711
    %v903 = vadd.f32 %v902, %v712
    %v904 = vrot.slane %v903, 4
    %v905 = vadd.f32 %v903, %v904
    %v906 = vrot.slane %v905, 2
    %v907 = vadd.f32 %v905, %v906
    %v908 = vrot.slane %v907, 1
    %v909 = vadd.f32 %v907, %v908
    %v910 = vrcp.pop 48.0
    %v911 = vmul.f32 %v909, %v910
    %v912 = vmul.f32 %v707, %v707
    %v913 = vmul.f32 %v708, %v708
    %v914 = vmul.f32 %v709, %v709
    %v915 = vmul.f32 %v710, %v710
    %v916 = vmul.f32 %v711, %v711
    %v917 = vmul.f32 %v712, %v712
    %v918 = vadd.f32 %v912, %v913
    %v919 = vadd.f32 %v918, %v914
    %v920 = vadd.f32 %v919, %v915
    %v921 = vadd.f32 %v920, %v916
    %v922 = vadd.f32 %v921, %v917
    %v923 = vrot.slane %v922, 4
    %v924 = vadd.f32 %v922, %v923
    %v925 = vrot.slane %v924, 2
    %v926 = vadd.f32 %v924, %v925
    %v927 = vrot.slane %v926, 1
    %v928 = vadd.f32 %v926, %v927
    %v929 = vmul.f32 %v928, %v910
    %v930 = vmul.f32 %v911, %v911
    %v931 = vsub.f32 %v929, %v930
    %v932 = vadd.f32 %v931, 1e-05
    %v933 = vrsqrt.pop %v932
    %v934 = vmul.f32 %v933, %v897
    %v935 = vlaneseq
    %v936 = vshrl.u32 %v935, 7
    %v937 = vsub.s32 0, %v936
    %v938 = vrot.slane %v934, %v937
    %v939 = vmul.f32 %v707, %v938
    %v940 = vmul.f32 %v708, %v938
    %v941 = vmul.f32 %v709, %v938
    %v942 = vmul.f32 %v710, %v938
    %v943 = vmul.f32 %v711, %v938
    %v944 = vmul.f32 %v712, %v938
    %v945 = vmul.f32 %v911, %v934
    %v946 = vsub.f32 %v898, %v945
    %v948 = vlaneseq
    %v949 = vshrl.u32 %v948, 7
    %v950 = vsub.s32 0, %v949
    %v951 = vrot.slane %v946, %v950
    %v953 = vadd.f32 %v939, %v951
    %v954 = vadd.f32 %v940, %v951
    %v955 = vadd.f32 %v941, %v951
    %v956 = vadd.f32 %v942, %v951
    %v957 = vadd.f32 %v943, %v951
    %v958 = vadd.f32 %v944, %v951
    %v959 = vmax.f32 %v953, 0.0
    %v960 = vmax.f32 %v954, 0.0
    %v961 = vmax.f32 %v955, 0.0
    %v962 = vmax.f32 %v956, 0.0
    %v963 = vmax.f32 %v957, 0.0
    %v964 = vmax.f32 %v958, 0.0
    %v965 = vadd.f32 %v77, %v895
    %v966 = vadd.f32 %v78, %v896
    %967 = vst [vmem:[#allocation8] sm:$0xff] %v965
    %968 = vst [vmem:[#allocation8 + $0x8] sm:$0xff] %v966
    %v969 = vadd.f32 %v79, %v959
    %v970 = vadd.f32 %v80, %v960
    %v971 = vadd.f32 %v81, %v961
    %v972 = vadd.f32 %v82, %v962
    %v973 = vadd.f32 %v83, %v963
    %v974 = vadd.f32 %v84, %v964
    %975 = vst [vmem:[#allocation9] sm:$0xff] %v969
    %976 = vst [vmem:[#allocation9 + $0x8] sm:$0xff] %v970
    %977 = vst [vmem:[#allocation9 + $0x10] sm:$0xff] %v971
    %978 = vst [vmem:[#allocation9 + $0x18] sm:$0xff] %v972
    %979 = vst [vmem:[#allocation9 + $0x20] sm:$0xff] %v973
    %980 = vst [vmem:[#allocation9 + $0x28] sm:$0xff] %v974
    // Predicated region
    $region62: #{gated_gcn_layer.1} parent=1 // pred_check
      _
    $region63: #{gated_gcn_layer.1} parent=1 // pred_check_branch
      %982 = sbr.rel (0) target = $region65
    $region64: #{gated_gcn_layer.1} parent=1 // pred_region
      %s984 = ssub.s32 256, 256
      %985 = vsyncadd [#allocation5], %s984
      %s986 = sshll.u32 [#allocation8], 4
      %s987 = int_to_ptr.vmem [resolvable:$true] %s986
      %992 = dma.vmem_to_hbm [thread:$0]  %s987, 256, %s13, [#allocation5], 128, 128, 8
    $region65: #{gated_gcn_layer.1} parent=1 // pred_fallthru
      _
    // Predicated region
    $region66: #{gated_gcn_layer.1} parent=1 // pred_check
      _
    $region67: #{gated_gcn_layer.1} parent=1 // pred_check_branch
      %994 = sbr.rel (0) target = $region69
    $region68: #{gated_gcn_layer.1} parent=1 // pred_region
      %s996 = ssub.s32 768, 768
      %997 = vsyncadd [#allocation10], %s996
      %s998 = sshll.u32 [#allocation9], 4
      %s999 = int_to_ptr.vmem [resolvable:$true] %s998
      %1004 = dma.vmem_to_hbm [thread:$0]  %s999, 768, %s14, [#allocation10], 128, 128, 8
    $region69: #{gated_gcn_layer.1} parent=1 // pred_fallthru
      _
    // Predicated region
    $region70: #{gated_gcn_layer.1} parent=1 // pred_check
      _
    $region71: #{gated_gcn_layer.1} parent=1 // pred_check_branch
      %1006 = sbr.rel (0) target = $region73
    $region72: #{gated_gcn_layer.1} parent=1 // pred_region
      %1007 = dma.done [#allocation5], 256
    $region73: #{gated_gcn_layer.1} parent=1 // pred_fallthru
      _
    // Predicated region
    $region74: #{gated_gcn_layer.1} parent=1 // pred_check
      _
    $region75: #{gated_gcn_layer.1} parent=1 // pred_check_branch
      %1009 = sbr.rel (0) target = $region77
    $region76: #{gated_gcn_layer.1} parent=1 // pred_region
      %1010 = dma.done [#allocation10], 768
    $region77: #{gated_gcn_layer.1} parent=1 // pred_fallthru
      _
    %1011 = vsyncpa [#allocation4], 1
    %1012 = vsyncpa [#allocation7], 1
    %1013 = vsyncpa [#allocation5], 1
    %1014 = vsyncpa [#allocation10], 1

</llo_original>
